<compile_context>
chip_gen: v5e
topology: v5e:2x2
jax: 0.10.0
libtpu: 0.0.40
codegen_flags: <defaults>
</compile_context>

<pallas_src>
import jax
import jax.numpy as jnp
from jax.experimental import pallas as pl
from jax.experimental.pallas import tpu as pltpu

_MAX_TILE_B = 4096   # rows per grid step cap (multiple of 8)
_SPLIT_B = 512       # above this, force >=2 grid steps (v7x megacore)


def _round_up(x, m):
    return ((x + m - 1) // m) * m


def _make_mlp_kernel(n_layers):
    """Fused n-layer (Linear+ReLU) kernel. Refs: x, (w, b)*n_layers, out."""
    def kernel(x_ref, *refs):
        o_ref = refs[-1]
        h = x_ref[...]
        for l in range(n_layers):
            w = refs[2 * l][...]
            b = refs[2 * l + 1][...]
            # Native-dtype MXU matmul, f32 accumulation.
            h = jnp.dot(h.astype(w.dtype), w, preferred_element_type=jnp.float32)
            h = jnp.maximum(h + b.astype(jnp.float32), 0.0)
        o_ref[...] = h.astype(o_ref.dtype)
    return kernel


def mlp_forward(x, weights, biases):
    """Fused MLP forward: x -> relu(Linear) repeated len(weights) times.

    x:        (B, in_dim)
    weights:  list of (in_features, out_features) arrays (i.e. PyTorch W^T)
    biases:   list of (out_features,) arrays
    """
    assert len(weights) == len(biases) and len(weights) >= 1
    n_layers = len(weights)
    B, in_dim = x.shape
    out_dim = weights[-1].shape[1]

    # Batch tile selection:
    #  - small batch: single full-extent block (no padding, one grid step)
    #  - large batch: >=2 tiles (megacore), capped at _MAX_TILE_B rows,
    #    ragged tail handled by Pallas' partial last block (no pad/slice).
    if B <= _SPLIT_B:
        tb = B
    else:
        tb = min(_MAX_TILE_B, _round_up(pl.cdiv(B, 2), 8))
    grid = (pl.cdiv(B, tb),)

    in_specs = [pl.BlockSpec((tb, in_dim), lambda i: (i, 0))]   # x tile
    params = []
    for w, b in zip(weights, biases):
        b2d = b.reshape(1, b.shape[0])                          # (1, N) slab
        in_specs.append(pl.BlockSpec(w.shape, lambda i: (0, 0)))    # resident W
        in_specs.append(pl.BlockSpec(b2d.shape, lambda i: (0, 0)))  # resident b
        params.extend([w, b2d])

    return pl.pallas_call(
        _make_mlp_kernel(n_layers),
        out_shape=jax.ShapeDtypeStruct((B, out_dim), x.dtype),
        grid_spec=pltpu.PrefetchScalarGridSpec(
            num_scalar_prefetch=0,
            grid=grid,
            in_specs=in_specs,
            out_specs=pl.BlockSpec((tb, out_dim), lambda i: (i, 0)),
        ),
        compiler_params=pltpu.CompilerParams(
            dimension_semantics=("parallel",),      # shard batch tiles across TCs
            vmem_limit_bytes=32 * 1024 * 1024,      # headroom for tb=4096 tiles
        ),
    )(x, *params)


if __name__ == "__main__":
    key = jax.random.PRNGKey(0)
    k_x, k_w1, k_b1, k_w2, k_b2, k_x2 = jax.random.split(key, 6)

    # Shapes implied by the module defaults: input_dim=7, hidden_dim=64.
    input_dim, hidden_dim = 7, 64

    # Weights stored as (in_features, out_features), i.e. PyTorch W^T.
    w1 = jax.random.normal(k_w1, (input_dim, hidden_dim), jnp.float32) / jnp.sqrt(input_dim)
    b1 = jax.random.normal(k_b1, (hidden_dim,), jnp.float32) * 0.1
    w2 = jax.random.normal(k_w2, (hidden_dim, hidden_dim), jnp.float32) / jnp.sqrt(hidden_dim)
    b2 = jax.random.normal(k_b2, (hidden_dim,), jnp.float32) * 0.1

    def ref_fn(xv):
        h = jnp.maximum(xv @ w1 + b1, 0.0)
        return jnp.maximum(h @ w2 + b2, 0.0)

    # Test both paths: small single-block batch, and a ragged large batch that
    # exercises the multi-step grid with a partial (OOB-masked) last block.
    for batch, kx in ((8, k_x), (1537, k_x2)):
        x = jax.random.normal(kx, (batch, input_dim), dtype=jnp.float32)
        out = jax.block_until_ready(mlp_forward(x, [w1, w2], [b1, b2]))
        ref = ref_fn(x)
        assert out.shape == (batch, hidden_dim) and out.dtype == x.dtype
        assert jnp.allclose(out, ref, atol=1e-5, rtol=1e-5)

    print("KERNEL_OK")
</pallas_src>

<mosaic_0001>
module attributes {stable_mosaic.version = 11 : i64} {
  func.func @kernel(%arg0: i32, %arg1: memref<8x7xf32, #tpu.memory_space<vmem>>, %arg2: memref<7x64xf32, #tpu.memory_space<vmem>>, %arg3: memref<1x64xf32, #tpu.memory_space<vmem>>, %arg4: memref<64x64xf32, #tpu.memory_space<vmem>>, %arg5: memref<1x64xf32, #tpu.memory_space<vmem>>, %arg6: memref<8x64xf32, #tpu.memory_space<vmem>>) attributes {dimension_semantics = [#tpu.dimension_semantics<parallel>], iteration_bounds = array<i64: 1>, scalar_prefetch = 0 : i64, scratch_operands = 0 : i64, tpu.core_type = #tpu.core_type<tc>, window_params = [{transform_indices = @transform_0, window_bounds = array<i64: 8, 7>}, {pipeline_mode = #tpu.pipeline_mode<synchronous>, transform_indices = @transform_1, window_bounds = array<i64: 7, 64>}, {pipeline_mode = #tpu.pipeline_mode<synchronous>, transform_indices = @transform_2, window_bounds = array<i64: 1, 64>}, {pipeline_mode = #tpu.pipeline_mode<synchronous>, transform_indices = @transform_3, window_bounds = array<i64: 64, 64>}, {pipeline_mode = #tpu.pipeline_mode<synchronous>, transform_indices = @transform_4, window_bounds = array<i64: 1, 64>}, {transform_indices = @transform_5, window_bounds = array<i64: 8, 64>}]} {
    %c0 = arith.constant 0 : index
    %c0_0 = arith.constant 0 : index
    %0 = vector.load %arg1[%c0, %c0_0] : memref<8x7xf32, #tpu.memory_space<vmem>>, vector<8x7xf32>
    %c0_1 = arith.constant 0 : index
    %c0_2 = arith.constant 0 : index
    %1 = vector.load %arg2[%c0_1, %c0_2] : memref<7x64xf32, #tpu.memory_space<vmem>>, vector<7x64xf32>
    %c0_3 = arith.constant 0 : index
    %c0_4 = arith.constant 0 : index
    %2 = vector.load %arg3[%c0_3, %c0_4] : memref<1x64xf32, #tpu.memory_space<vmem>>, vector<1x64xf32>
    %cst = arith.constant dense<0.000000e+00> : vector<8x64xf32>
    %3 = tpu.matmul %0, %1, %cst {dimension_numbers = #tpu.dot_dimension_numbers<[1], [0], [0], [1], [0, 0, 1, 1], [], []>} : vector<8x7xf32>, vector<7x64xf32>, vector<8x64xf32> -> vector<8x64xf32>
    %4 = vector.broadcast %2 : vector<1x64xf32> to vector<8x64xf32>
    %5 = arith.addf %3, %4 : vector<8x64xf32>
    %cst_5 = arith.constant 0.000000e+00 : f32
    %6 = vector.broadcast %cst_5 : f32 to vector<8x64xf32>
    %7 = arith.maximumf %5, %6 : vector<8x64xf32>
    %c0_6 = arith.constant 0 : index
    %c0_7 = arith.constant 0 : index
    %8 = vector.load %arg4[%c0_6, %c0_7] : memref<64x64xf32, #tpu.memory_space<vmem>>, vector<64x64xf32>
    %c0_8 = arith.constant 0 : index
    %c0_9 = arith.constant 0 : index
    %9 = vector.load %arg5[%c0_8, %c0_9] : memref<1x64xf32, #tpu.memory_space<vmem>>, vector<1x64xf32>
    %cst_10 = arith.constant dense<0.000000e+00> : vector<8x64xf32>
    %10 = tpu.matmul %7, %8, %cst_10 {dimension_numbers = #tpu.dot_dimension_numbers<[1], [0], [0], [1], [0, 0, 1, 1], [], []>} : vector<8x64xf32>, vector<64x64xf32>, vector<8x64xf32> -> vector<8x64xf32>
    %11 = vector.broadcast %9 : vector<1x64xf32> to vector<8x64xf32>
    %12 = arith.addf %10, %11 : vector<8x64xf32>
    %cst_11 = arith.constant 0.000000e+00 : f32
    %13 = vector.broadcast %cst_11 : f32 to vector<8x64xf32>
    %14 = arith.maximumf %12, %13 : vector<8x64xf32>
    %c0_12 = arith.constant 0 : index
    %c0_13 = arith.constant 0 : index
    %15 = vector.load %arg6[%c0_12, %c0_13] : memref<8x64xf32, #tpu.memory_space<vmem>>, vector<8x64xf32>
    tpu.vector_store %arg6[%c0_12, %c0_13], %14 {strides = array<i32>} : memref<8x64xf32, #tpu.memory_space<vmem>>, vector<8x64xf32>,
    return
  }
  func.func @transform_0(%arg0: i32) -> (i32, i32) {
    %c0_i32 = arith.constant 0 : i32
    %c0_i32_0 = arith.constant 0 : i32
    return %arg0, %c0_i32 : i32, i32
  }
  func.func @transform_1(%arg0: i32) -> (i32, i32) {
    %c0_i32 = arith.constant 0 : i32
    %c0_i32_0 = arith.constant 0 : i32
    %c0_i32_1 = arith.constant 0 : i32
    return %c0_i32, %c0_i32_0 : i32, i32
  }
  func.func @transform_2(%arg0: i32) -> (i32, i32) {
    %c0_i32 = arith.constant 0 : i32
    %c0_i32_0 = arith.constant 0 : i32
    %c0_i32_1 = arith.constant 0 : i32
    return %c0_i32, %c0_i32_0 : i32, i32
  }
  func.func @transform_3(%arg0: i32) -> (i32, i32) {
    %c0_i32 = arith.constant 0 : i32
    %c0_i32_0 = arith.constant 0 : i32
    %c0_i32_1 = arith.constant 0 : i32
    return %c0_i32, %c0_i32_0 : i32, i32
  }
  func.func @transform_4(%arg0: i32) -> (i32, i32) {
    %c0_i32 = arith.constant 0 : i32
    %c0_i32_0 = arith.constant 0 : i32
    %c0_i32_1 = arith.constant 0 : i32
    return %c0_i32, %c0_i32_0 : i32, i32
  }
  func.func @transform_5(%arg0: i32) -> (i32, i32) {
    %c0_i32 = arith.constant 0 : i32
    %c0_i32_0 = arith.constant 0 : i32
    return %arg0, %c0_i32 : i32, i32
  }
}

</mosaic_0001>

<llo_original>
// kernel: tpu_custom_call.1
$region0: #{tpu_custom_call.1}
  #allocation0 [shape = 'u32[]', space=smem, size = 0x4, offset = 0x4, fixed_abs, tag = 'smem constant byte address 0x4 - core index']
  #allocation1 [shape = 'u32[72,128]{1,0:T(1,128)}', space=vmem, size = 0x9000, scoped, tag = 'internal scratch']
  %s0 = inlined_call_operand.hbm [shape: f32[8,7], index: 0, kind: input, shape index: {}]
  %s1 = inlined_call_operand.hbm [shape: f32[7,64], index: 1, kind: input, shape index: {}]
  %s2 = inlined_call_operand.vmem [shape: f32[1,64], index: 2, kind: input, shape index: {}]
  %s3 = inlined_call_operand.hbm [shape: f32[64,64], index: 3, kind: input, shape index: {}]
  %s4 = inlined_call_operand.vmem [shape: f32[1,64], index: 4, kind: input, shape index: {}]
  %s5 = inlined_call_operand.hbm [shape: f32[8,64], index: 5, kind: output, shape index: {}]
  %s6 = sld [smem:[#allocation0]]
  $region42: #{tpu_custom_call.1} parent=0
    _
  %s8 = ssub.s32 1, %s6
  %s9 = scalar_select 0, %s8, %s6
  $region1: #{tpu_custom_call.1} parent=0
    #allocation2 [shape = 'u8[4096]{0}', space=vmem, size = 0x1000, scoped, tag = 'input window, operand 0, single buffered']
    #allocation3 [shape = 's32[1]{0}', space=sflag, size = 0x4, scoped, tag = 'scoped memory for tpu_custom_call.1']
    #allocation4 [shape = 's32[1]{0}', space=sflag, size = 0x4, scoped, tag = 'scoped memory for tpu_custom_call.1']
    #allocation5 [shape = 'u8[4096]{0}', space=vmem, size = 0x1000, scoped, tag = 'input window, operand 1, single buffered']
    #allocation6 [shape = 's32[1]{0}', space=sflag, size = 0x4, scoped, tag = 'scoped memory for tpu_custom_call.1']
    #allocation7 [shape = 'u8[32768]{0}', space=vmem, size = 0x8000, scoped, tag = 'input window, operand 3, single buffered']
    #allocation8 [shape = 'u8[4096]{0}', space=vmem, size = 0x1000, scoped, tag = 'output window, operand 0, single buffered']
    %10 = vsyncpa [#allocation3], 0
    %11 = vsyncpa [#allocation6], 0
    %12 = vsyncpa [#allocation4], 0
    // Predicated region
    $region2: #{tpu_custom_call.1} parent=1 // pred_check
      _
    $region3: #{tpu_custom_call.1} parent=1 // pred_check_branch
      %14 = sbr.rel (0) target = $region5
    $region4: #{tpu_custom_call.1} parent=1 // pred_region
      %16 = vsyncadd [#allocation3], 0
      %s18 = sshll.u32 %s0, 4
      %s19 = int_to_ptr.hbm [resolvable:$true] %s18
      %s20 = sshll.u32 [#allocation2], 4
      %s21 = int_to_ptr.vmem [resolvable:$true] %s20
      %23 = dma.hbm_to_vmem [thread:$0]  %s19, 128, %s21, [#allocation3]
    $region5: #{tpu_custom_call.1} parent=1 // pred_fallthru
      _
    // Predicated region
    $region6: #{tpu_custom_call.1} parent=1 // pred_check
      _
    $region7: #{tpu_custom_call.1} parent=1 // pred_check_branch
      %25 = sbr.rel (0) target = $region9
    $region8: #{tpu_custom_call.1} parent=1 // pred_region
      %27 = vsyncadd [#allocation6], 0
      %s29 = sshll.u32 %s1, 4
      %s30 = int_to_ptr.hbm [resolvable:$true] %s29
      %s31 = sshll.u32 [#allocation5], 4
      %s32 = int_to_ptr.vmem [resolvable:$true] %s31
      %34 = dma.hbm_to_vmem [thread:$0]  %s30, 128, %s32, [#allocation6]
    $region9: #{tpu_custom_call.1} parent=1 // pred_fallthru
      _
    // Predicated region
    $region10: #{tpu_custom_call.1} parent=1 // pred_check
      _
    $region11: #{tpu_custom_call.1} parent=1 // pred_check_branch
      %36 = sbr.rel (0) target = $region13
    $region12: #{tpu_custom_call.1} parent=1 // pred_region
      _
    $region13: #{tpu_custom_call.1} parent=1 // pred_fallthru
      _
    // Predicated region
    $region14: #{tpu_custom_call.1} parent=1 // pred_check
      _
    $region15: #{tpu_custom_call.1} parent=1 // pred_check_branch
      %38 = sbr.rel (0) target = $region17
    $region16: #{tpu_custom_call.1} parent=1 // pred_region
      %40 = vsyncadd [#allocation6], 0
      %s41 = sshll.u32 %s3, 4
      %s42 = int_to_ptr.hbm [resolvable:$true] %s41
      %s43 = sshll.u32 [#allocation7], 4
      %s44 = int_to_ptr.vmem [resolvable:$true] %s43
      %49 = dma.hbm_to_vmem [thread:$0]  %s42, 1024, %s44, [#allocation6], 128, 128, 8
    $region17: #{tpu_custom_call.1} parent=1 // pred_fallthru
      _
    // Predicated region
    $region18: #{tpu_custom_call.1} parent=1 // pred_check
      _
    $region19: #{tpu_custom_call.1} parent=1 // pred_check_branch
      %51 = sbr.rel (0) target = $region21
    $region20: #{tpu_custom_call.1} parent=1 // pred_region
      _
    $region21: #{tpu_custom_call.1} parent=1 // pred_fallthru
      _
    // Predicated region
    $region22: #{tpu_custom_call.1} parent=1 // pred_check
      _
    $region23: #{tpu_custom_call.1} parent=1 // pred_check_branch
      %53 = sbr.rel (0) target = $region25
    $region24: #{tpu_custom_call.1} parent=1 // pred_region
      %55 = dma.done [#allocation3], 128
    $region25: #{tpu_custom_call.1} parent=1 // pred_fallthru
      _
    // Predicated region
    $region26: #{tpu_custom_call.1} parent=1 // pred_check
      _
    $region27: #{tpu_custom_call.1} parent=1 // pred_check_branch
      %57 = sbr.rel (0) target = $region29
    $region28: #{tpu_custom_call.1} parent=1 // pred_region
      %59 = dma.done [#allocation6], 128
    $region29: #{tpu_custom_call.1} parent=1 // pred_fallthru
      _
    // Predicated region
    $region30: #{tpu_custom_call.1} parent=1 // pred_check
      _
    $region31: #{tpu_custom_call.1} parent=1 // pred_check_branch
      %61 = sbr.rel (0) target = $region33
    $region32: #{tpu_custom_call.1} parent=1 // pred_region
      %63 = dma.done [#allocation6], 1024
    $region33: #{tpu_custom_call.1} parent=1 // pred_fallthru
      _
    %v64 = vld [vmem:[#allocation2] sm:$0xff]
    %v65 = vld [vmem:[#allocation5] sm:$0x7f]
    %v66 = vld [vmem:[%s2] sm:$0x1]
    %v68 = vperm.slane %v66, 0
    %vm70 = vcmask 56320
    %v72 = vsel %vm70, %v64, 0
    %vm74 = vcmask 1046528
    %v76 = vsel %vm74, %v65, 0
    %78 = vmatpush.msra.mxu0 0.0
    %79 = vmatpush.msra.mxu0 0.0
    %80 = vmatpush.msra.mxu0 0.0
    %81 = vmatpush.msra.mxu0 0.0
    %82 = vmatpush.msra.mxu0 0.0
    %83 = vmatpush.msra.mxu0 0.0
    %84 = vmatpush.msra.mxu0 0.0
    %85 = vmatpush.msra.mxu0 0.0
    %86 = vmatpush.msra.mxu0 0.0
    %87 = vmatpush.msra.mxu0 0.0
    %88 = vmatpush.msra.mxu0 0.0
    %89 = vmatpush.msra.mxu0 0.0
    %90 = vmatpush.msra.mxu0 0.0
    %91 = vmatpush.msra.mxu0 0.0
    %92 = vmatpush.msra.mxu0 0.0
    %93 = vmatpush.msra.mxu0 %v76
    %94 = vmatmul.f32.gmra.mxu0 %v72
    %v95 = vpop.f32.mrf.mxu0
    %v96 = vadd.f32 %v68, %v95
    %97 = vdwg.mxu0
    %v98 = vmax.f32 %v96, 0.0
    %v99 = vld [vmem:[#allocation7] sm:$0xff]
    %v100 = vld [vmem:[#allocation7 + $0x8] sm:$0xff]
    %v101 = vld [vmem:[#allocation7 + $0x10] sm:$0xff]
    %v102 = vld [vmem:[#allocation7 + $0x18] sm:$0xff]
    %v103 = vld [vmem:[#allocation7 + $0x20] sm:$0xff]
    %v104 = vld [vmem:[#allocation7 + $0x28] sm:$0xff]
    %v105 = vld [vmem:[#allocation7 + $0x30] sm:$0xff]
    %v106 = vld [vmem:[#allocation7 + $0x38] sm:$0xff]
    %v107 = vld [vmem:[%s4] sm:$0x1]
    %v109 = vperm.slane %v107, 0
    %vm111 = vcmask 523264
    %v113 = vsel %vm111, %v98, 0
    %115 = vmatpush.msra.mxu0 0.0
    %116 = vmatpush.msra.mxu0 0.0
    %117 = vmatpush.msra.mxu0 0.0
    %118 = vmatpush.msra.mxu0 0.0
    %119 = vmatpush.msra.mxu0 0.0
    %120 = vmatpush.msra.mxu0 0.0
    %121 = vmatpush.msra.mxu0 0.0
    %122 = vmatpush.msra.mxu0 0.0
    %123 = vmatpush.msra.mxu0 %v106
    %124 = vmatpush.msra.mxu0 %v105
    %125 = vmatpush.msra.mxu0 %v104
    %126 = vmatpush.msra.mxu0 %v103
    %127 = vmatpush.msra.mxu0 %v102
    %128 = vmatpush.msra.mxu0 %v101
    %129 = vmatpush.msra.mxu0 %v100
    %130 = vmatpush.msra.mxu0 %v99
    %131 = vmatmul.f32.gmra.mxu0 %v113
    %v132 = vpop.f32.mrf.mxu0
    %v133 = vadd.f32 %v109, %v132
    %134 = vdwg.mxu0
    %v135 = vmax.f32 %v133, 0.0
    %136 = vst.msk [vmem:[#allocation8] sm:$0xff] %vm111, %v135
    // Predicated region
    $region34: #{tpu_custom_call.1} parent=1 // pred_check
      _
    $region35: #{tpu_custom_call.1} parent=1 // pred_check_branch
      %138 = sbr.rel (0) target = $region37
    $region36: #{tpu_custom_call.1} parent=1 // pred_region
      %140 = vsyncadd [#allocation4], 0
      %s142 = sshll.u32 [#allocation8], 4
      %s143 = int_to_ptr.vmem [resolvable:$true] %s142
      %s144 = sshll.u32 %s5, 4
      %s145 = int_to_ptr.hbm [resolvable:$true] %s144
      %147 = dma.vmem_to_hbm [thread:$0]  %s143, 128, %s145, [#allocation4]
    $region37: #{tpu_custom_call.1} parent=1 // pred_fallthru
      _
    // Predicated region
    $region38: #{tpu_custom_call.1} parent=1 // pred_check
      _
    $region39: #{tpu_custom_call.1} parent=1 // pred_check_branch
      %149 = sbr.rel (0) target = $region41
    $region40: #{tpu_custom_call.1} parent=1 // pred_region
      %151 = dma.done [#allocation4], 128
    $region41: #{tpu_custom_call.1} parent=1 // pred_fallthru
      _
    %152 = vsyncpa [#allocation3], 1
    %153 = vsyncpa [#allocation6], 1
    %154 = vsyncpa [#allocation4], 1

</llo_original>
